<compile_context>
chip_gen: v5e
topology: v5e:2x2
jax: 0.10.0
libtpu: 0.0.40
codegen_flags: <defaults>
</compile_context>

<pallas_src>
import functools

import jax
import jax.numpy as jnp
from jax.experimental import pallas as pl
from jax.experimental.pallas import tpu as pltpu


def _kd_loss_kernel(s_ref, t_ref, o_ref, *, inv_T, batch, tile_b, mask_rows):
    i = pl.program_id(0)

    s = s_ref[...].astype(jnp.float32)
    t = t_ref[...].astype(jnp.float32)
    if inv_T != 1.0:  # trace-time constant; multiply instead of divide
        s = s * jnp.float32(inv_T)
        t = t * jnp.float32(inv_T)

    d = t - s                                               # (TB, C)

    # Student: per-row log-sum-exp (class axis = last axis = lanes).
    s_max = jnp.max(s, axis=1, keepdims=True)
    s_lse = jnp.log(jnp.sum(jnp.exp(s - s_max), axis=1, keepdims=True))

    # Teacher: shifted exp and un-normalized row sum.
    t_max = jnp.max(t, axis=1, keepdims=True)
    t_exp = jnp.exp(t - t_max)
    t_sum = jnp.sum(t_exp, axis=1, keepdims=True)
    log_t_sum = jnp.log(t_sum)

    # sum_c p_t * (log p_t - log p_s)
    #   = (1/t_sum) * sum_c t_exp * ((t - s) + (s_max - t_max) + s_lse - log t_sum)
    row_const = (s_max - t_max) + (s_lse - log_t_sum)       # (TB, 1)
    weighted = t_exp * (d + row_const)                      # (TB, C) elementwise
    row_sum = jnp.sum(weighted, axis=1, keepdims=True)      # (TB, 1)
    kl_row = row_sum / t_sum                                # tiny per-row divide

    if mask_rows:
        # Partial last tile: padding rows hold stale VMEM data; every op above
        # is row-local, so just zero those rows before the tile reduction.
        row_ids = jax.lax.broadcasted_iota(jnp.int32, kl_row.shape, 0) + i * tile_b
        kl_row = jnp.where(row_ids < batch, kl_row, jnp.float32(0.0))

    # Per-tile partial sum, broadcast into this step's own aligned (8,128)
    # output block (lane- and sublane-dense store; wrapper picks [0, 0]).
    tile_partial = jnp.sum(kl_row)
    o_ref[...] = jnp.full(o_ref.shape, tile_partial, dtype=jnp.float32)


def _vmem_capacity_bytes():
    try:
        return int(pltpu.get_tpu_info().vmem_capacity_bytes)
    except Exception:
        return 64 * 1024 * 1024  # conservative: v7x per-TC physical VMEM


def _pick_tile_b(B, C, itemsize, vmem_cap):
    """Biggest batch tile whose double-buffered inputs plus ~6 live f32 [TB,C]
    temporaries fit a generation-aware VMEM budget."""
    budget = min(32 << 20, vmem_cap // 4)
    # 2 inputs x 2 pipeline buffers in input dtype + ~6 f32 [TB,C] temporaries
    # (s, t, d, exp(s-smax), t_exp, weighted).
    per_row_bytes = 4 * C * itemsize + 6 * C * 4
    # Sublane-packing alignment: 8 rows for f32, 16 for bf16, 32 for int8/fp8.
    align = max(8, 32 // max(int(itemsize), 1))
    tb = budget // max(per_row_bytes, 1)
    tb = max(align, (tb // align) * align)
    if tb >= B:
        return B                 # single full-extent block (any B allowed)
    return int(tb)               # alignment multiple -> satisfies (8,128) rule
    # TODO(synk): when even `align` rows of whole-C blocks exceed the budget
    # (vocab-scale C on v7x), tile the class axis instead of forcing rows.


def knowledge_distillation_loss(student_logits, teacher_logits, T=1.0, tile_b=None):
    """student_logits, teacher_logits: [B, C]. Returns scalar f32 loss."""
    assert student_logits.shape == teacher_logits.shape
    B, C = student_logits.shape
    itemsize = jnp.dtype(student_logits.dtype).itemsize
    vmem_cap = _vmem_capacity_bytes()

    if tile_b is None:
        tile_b = _pick_tile_b(B, C, itemsize, vmem_cap)
    tile_b = int(min(tile_b, B))
    n_steps = int(pl.cdiv(B, tile_b))
    mask_rows = (B % tile_b) != 0

    kernel = functools.partial(
        _kd_loss_kernel, inv_T=1.0 / float(T), batch=B, tile_b=tile_b,
        mask_rows=mask_rows)

    # Generation-aware scoped-VMEM limit: double-buffered inputs + f32 temps
    # + output blocks, with 2x slack, capped at 3/4 of physical VMEM.
    block_bytes = tile_b * C * itemsize
    vmem_needed = 4 * block_bytes + 6 * tile_b * C * 4 + 4 * 8 * 128 * 4
    vmem_limit = int(min(vmem_cap * 3 // 4, max(32 << 20, 2 * vmem_needed)))

    out_rows = 8 * n_steps
    cost = pl.CostEstimate(
        flops=10 * B * C,
        transcendentals=2 * B * C + 3 * B,
        bytes_accessed=2 * B * C * itemsize + out_rows * 128 * 4,
    )

    out = pl.pallas_call(
        kernel,
        out_shape=jax.ShapeDtypeStruct((out_rows, 128), jnp.float32),
        grid=(n_steps,),
        in_specs=[
            pl.BlockSpec((tile_b, C), lambda i: (i, 0)),
            pl.BlockSpec((tile_b, C), lambda i: (i, 0)),
        ],
        out_specs=pl.BlockSpec((8, 128), lambda i: (i, 0)),
        compiler_params=pltpu.CompilerParams(
            # Each grid step owns its own output block -> batch axis is
            # independent -> megacore sharding on v7x.
            dimension_semantics=("parallel",),
            vmem_limit_bytes=vmem_limit,
        ),
        cost_estimate=cost,
    )(student_logits, teacher_logits)

    # One partial per tile lives at row 8*i, lane 0 (all lanes/rows of a block
    # are identical); final reduction + batchmean happen in the wrapper.
    return jnp.sum(out[0::8, 0]) / jnp.float32(B)


def _reference(student_logits, teacher_logits, T=1.0):
    s = student_logits.astype(jnp.float32) / T
    t = teacher_logits.astype(jnp.float32) / T
    log_p_s = jax.nn.log_softmax(s, axis=1)
    p_t = jax.nn.softmax(t, axis=1)
    log_p_t = jax.nn.log_softmax(t, axis=1)
    return jnp.sum(p_t * (log_p_t - log_p_s)) / s.shape[0]


if __name__ == "__main__":
    key = jax.random.PRNGKey(0)
    k1, k2, k3, k4, k5, k6 = jax.random.split(key, 6)

    # Case 1: small shapes matching the module's intent (B=8, C=32), T=1.
    B, C = 8, 32
    student = jax.random.normal(k1, (B, C), dtype=jnp.float32)
    teacher = jax.random.normal(k2, (B, C), dtype=jnp.float32)

    loss = knowledge_distillation_loss(student, teacher, T=1.0)
    jax.block_until_ready(loss)
    ref = _reference(student, teacher, T=1.0)
    assert jnp.allclose(loss, ref, atol=1e-5, rtol=1e-4), (loss, ref)

    # Case 2: temperature != 1 (exercises the 1/T multiply path).
    loss2 = knowledge_distillation_loss(student, teacher, T=2.0)
    jax.block_until_ready(loss2)
    ref2 = _reference(student, teacher, T=2.0)
    assert jnp.allclose(loss2, ref2, atol=1e-5, rtol=1e-4), (loss2, ref2)

    # Case 3: multi-tile grid with a partial last tile (B=20, tile_b=8)
    # -> exercises parallel per-tile partials + padding-row masking.
    B3, C3 = 20, 128
    student3 = jax.random.normal(k3, (B3, C3), dtype=jnp.float32)
    teacher3 = jax.random.normal(k4, (B3, C3), dtype=jnp.float32)
    loss3 = knowledge_distillation_loss(student3, teacher3, T=3.0, tile_b=8)
    jax.block_until_ready(loss3)
    ref3 = _reference(student3, teacher3, T=3.0)
    assert jnp.allclose(loss3, ref3, atol=1e-5, rtol=1e-4), (loss3, ref3)

    # Case 4: bf16 inputs with a 16-row tile (sublane-packing alignment path)
    # and a partial last tile.
    B4, C4 = 24, 256
    student4 = jax.random.normal(k5, (B4, C4), dtype=jnp.float32).astype(jnp.bfloat16)
    teacher4 = jax.random.normal(k6, (B4, C4), dtype=jnp.float32).astype(jnp.bfloat16)
    loss4 = knowledge_distillation_loss(student4, teacher4, T=2.0, tile_b=16)
    jax.block_until_ready(loss4)
    ref4 = _reference(student4, teacher4, T=2.0)
    assert jnp.allclose(loss4, ref4, atol=1e-5, rtol=1e-3), (loss4, ref4)

    print("KERNEL_OK")
</pallas_src>

<mosaic_0001>
module attributes {stable_mosaic.version = 11 : i64} {
  func.func @_kd_loss_kernel(%arg0: i32, %arg1: memref<8x32xf32, #tpu.memory_space<vmem>>, %arg2: memref<8x32xf32, #tpu.memory_space<vmem>>, %arg3: memref<8x128xf32, #tpu.memory_space<vmem>>) attributes {dimension_semantics = [#tpu.dimension_semantics<parallel>], iteration_bounds = array<i64: 1>, scalar_prefetch = 0 : i64, scratch_operands = 0 : i64, tpu.core_type = #tpu.core_type<tc>, window_params = [{transform_indices = @transform_0, window_bounds = array<i64: 8, 32>}, {transform_indices = @transform_1, window_bounds = array<i64: 8, 32>}, {transform_indices = @transform_2, window_bounds = array<i64: 8, 128>}]} {
    %c0 = arith.constant 0 : index
    %c0_0 = arith.constant 0 : index
    %0 = vector.load %arg1[%c0, %c0_0] : memref<8x32xf32, #tpu.memory_space<vmem>>, vector<8x32xf32>
    %c0_1 = arith.constant 0 : index
    %c0_2 = arith.constant 0 : index
    %1 = vector.load %arg2[%c0_1, %c0_2] : memref<8x32xf32, #tpu.memory_space<vmem>>, vector<8x32xf32>
    %2 = arith.subf %1, %0 : vector<8x32xf32>
    %cst = arith.constant dense<0xFF800000> : vector<8xf32>
    %3 = vector.multi_reduction <maximumf>, %0, %cst [1] : vector<8x32xf32> to vector<8xf32>
    %4 = vector.shape_cast %3 : vector<8xf32> to vector<8x1xf32>
    %5 = vector.broadcast %4 : vector<8x1xf32> to vector<8x32xf32>
    %6 = arith.subf %0, %5 : vector<8x32xf32>
    %7 = math.exp %6 : vector<8x32xf32>
    %cst_3 = arith.constant dense<0.000000e+00> : vector<8xf32>
    %8 = vector.multi_reduction <add>, %7, %cst_3 [1] : vector<8x32xf32> to vector<8xf32>
    %9 = vector.shape_cast %8 : vector<8xf32> to vector<8x1xf32>
    %10 = math.log %9 : vector<8x1xf32>
    %cst_4 = arith.constant dense<0xFF800000> : vector<8xf32>
    %11 = vector.multi_reduction <maximumf>, %1, %cst_4 [1] : vector<8x32xf32> to vector<8xf32>
    %12 = vector.shape_cast %11 : vector<8xf32> to vector<8x1xf32>
    %13 = vector.broadcast %12 : vector<8x1xf32> to vector<8x32xf32>
    %14 = arith.subf %1, %13 : vector<8x32xf32>
    %15 = math.exp %14 : vector<8x32xf32>
    %cst_5 = arith.constant dense<0.000000e+00> : vector<8xf32>
    %16 = vector.multi_reduction <add>, %15, %cst_5 [1] : vector<8x32xf32> to vector<8xf32>
    %17 = vector.shape_cast %16 : vector<8xf32> to vector<8x1xf32>
    %18 = math.log %17 : vector<8x1xf32>
    %19 = arith.subf %4, %12 : vector<8x1xf32>
    %20 = arith.subf %10, %18 : vector<8x1xf32>
    %21 = arith.addf %19, %20 : vector<8x1xf32>
    %22 = vector.broadcast %21 : vector<8x1xf32> to vector<8x32xf32>
    %23 = arith.addf %2, %22 : vector<8x32xf32>
    %24 = arith.mulf %15, %23 : vector<8x32xf32>
    %cst_6 = arith.constant dense<0.000000e+00> : vector<8xf32>
    %25 = vector.multi_reduction <add>, %24, %cst_6 [1] : vector<8x32xf32> to vector<8xf32>
    %26 = vector.shape_cast %25 : vector<8xf32> to vector<8x1xf32>
    %27 = arith.divf %26, %17 : vector<8x1xf32>
    %28 = vector.shape_cast %27 : vector<8x1xf32> to vector<1x8x1xf32>
    %cst_7 = arith.constant dense<0.000000e+00> : vector<1xf32>
    %29 = vector.multi_reduction <add>, %28, %cst_7 [1, 2] : vector<1x8x1xf32> to vector<1xf32>
    %30 = vector.shape_cast %29 : vector<1xf32> to vector<1x1x1xf32>
    %31 = vector.extract %30[0, 0, 0] : f32 from vector<1x1x1xf32>
    %32 = vector.broadcast %31 : f32 to vector<8x128xf32>
    %c0_8 = arith.constant 0 : index
    %c0_9 = arith.constant 0 : index
    %33 = vector.load %arg3[%c0_8, %c0_9] : memref<8x128xf32, #tpu.memory_space<vmem>>, vector<8x128xf32>
    tpu.vector_store %arg3[%c0_8, %c0_9], %32 {strides = array<i32>} : memref<8x128xf32, #tpu.memory_space<vmem>>, vector<8x128xf32>,
    return
  }
  func.func @transform_0(%arg0: i32) -> (i32, i32) {
    %c0_i32 = arith.constant 0 : i32
    %c0_i32_0 = arith.constant 0 : i32
    return %arg0, %c0_i32 : i32, i32
  }
  func.func @transform_1(%arg0: i32) -> (i32, i32) {
    %c0_i32 = arith.constant 0 : i32
    %c0_i32_0 = arith.constant 0 : i32
    return %arg0, %c0_i32 : i32, i32
  }
  func.func @transform_2(%arg0: i32) -> (i32, i32) {
    %c0_i32 = arith.constant 0 : i32
    %c0_i32_0 = arith.constant 0 : i32
    return %arg0, %c0_i32 : i32, i32
  }
}

</mosaic_0001>

<llo_original>
// kernel: tpu_custom_call.1
$region0: #{tpu_custom_call.1}
  #allocation0 [shape = 'u32[]', space=smem, size = 0x4, offset = 0x4, fixed_abs, tag = 'smem constant byte address 0x4 - core index']
  #allocation1 [shape = 'u32[72,128]{1,0:T(1,128)}', space=vmem, size = 0x9000, scoped, tag = 'internal scratch']
  %s0 = inlined_call_operand.hbm [shape: f32[8,32], index: 0, kind: input, shape index: {}]
  %s1 = inlined_call_operand.hbm [shape: f32[8,32], index: 1, kind: input, shape index: {}]
  %s2 = inlined_call_operand.hbm [shape: f32[8,128], index: 2, kind: output, shape index: {}]
  %s3 = sld [smem:[#allocation0]]
  $region26: #{tpu_custom_call.1} parent=0
    _
  %s5 = ssub.s32 1, %s3
  %s6 = scalar_select 0, %s5, %s3
  $region1: #{tpu_custom_call.1} parent=0
    #allocation2 [shape = 'u8[4096]{0}', space=vmem, size = 0x1000, scoped, tag = 'input window, operand 0, single buffered']
    #allocation3 [shape = 's32[1]{0}', space=sflag, size = 0x4, scoped, tag = 'scoped memory for tpu_custom_call.1']
    #allocation4 [shape = 's32[1]{0}', space=sflag, size = 0x4, scoped, tag = 'scoped memory for tpu_custom_call.1']
    #allocation5 [shape = 'u8[4096]{0}', space=vmem, size = 0x1000, scoped, tag = 'input window, operand 1, single buffered']
    #allocation6 [shape = 's32[1]{0}', space=sflag, size = 0x4, scoped, tag = 'scoped memory for tpu_custom_call.1']
    #allocation7 [shape = 'u8[4096]{0}', space=vmem, size = 0x1000, scoped, tag = 'output window, operand 0, single buffered']
    %7 = vsyncpa [#allocation3], 0
    %8 = vsyncpa [#allocation6], 0
    %9 = vsyncpa [#allocation4], 0
    // Predicated region
    $region2: #{tpu_custom_call.1} parent=1 // pred_check
      _
    $region3: #{tpu_custom_call.1} parent=1 // pred_check_branch
      %11 = sbr.rel (0) target = $region5
    $region4: #{tpu_custom_call.1} parent=1 // pred_region
      %13 = vsyncadd [#allocation3], 0
      %s15 = sshll.u32 %s0, 4
      %s16 = int_to_ptr.hbm [resolvable:$true] %s15
      %s17 = sshll.u32 [#allocation2], 4
      %s18 = int_to_ptr.vmem [resolvable:$true] %s17
      %20 = dma.hbm_to_vmem [thread:$0]  %s16, 128, %s18, [#allocation3]
    $region5: #{tpu_custom_call.1} parent=1 // pred_fallthru
      _
    // Predicated region
    $region6: #{tpu_custom_call.1} parent=1 // pred_check
      _
    $region7: #{tpu_custom_call.1} parent=1 // pred_check_branch
      %22 = sbr.rel (0) target = $region9
    $region8: #{tpu_custom_call.1} parent=1 // pred_region
      %24 = vsyncadd [#allocation6], 0
      %s26 = sshll.u32 %s1, 4
      %s27 = int_to_ptr.hbm [resolvable:$true] %s26
      %s28 = sshll.u32 [#allocation5], 4
      %s29 = int_to_ptr.vmem [resolvable:$true] %s28
      %31 = dma.hbm_to_vmem [thread:$0]  %s27, 128, %s29, [#allocation6]
    $region9: #{tpu_custom_call.1} parent=1 // pred_fallthru
      _
    // Predicated region
    $region10: #{tpu_custom_call.1} parent=1 // pred_check
      _
    $region11: #{tpu_custom_call.1} parent=1 // pred_check_branch
      %33 = sbr.rel (0) target = $region13
    $region12: #{tpu_custom_call.1} parent=1 // pred_region
      %35 = dma.done [#allocation3], 128
    $region13: #{tpu_custom_call.1} parent=1 // pred_fallthru
      _
    // Predicated region
    $region14: #{tpu_custom_call.1} parent=1 // pred_check
      _
    $region15: #{tpu_custom_call.1} parent=1 // pred_check_branch
      %37 = sbr.rel (0) target = $region17
    $region16: #{tpu_custom_call.1} parent=1 // pred_region
      %39 = dma.done [#allocation6], 128
    $region17: #{tpu_custom_call.1} parent=1 // pred_fallthru
      _
    %v40 = vld [vmem:[#allocation2] sm:$0xff]
    %v41 = vld [vmem:[#allocation5] sm:$0xff]
    %v42 = vsub.f32 %v41, %v40
    %vm43 = vcmask 261120
    %v44 = vsel %vm43, %v40, -inf
    %45 = vmax.xlane.f32.xlu0 %v44
    %v46 = vpop.xlane.xlu0 %45
    %v47 = vsub.f32 %v40, %v46
    %v48 = vmul.f32 %v47, 1.442695
    %v49 = vpow.pop %v48
    %v50 = vsel %vm43, %v49, 0.0
    %51 = vadd.xlane.f32.xlu0 %v50
    %v52 = vpop.xlane.xlu0 %51
    %v53 = vlog2.pop %v52
    %v54 = vmul.f32 %v53, 0.6931472
    %v55 = vsel %vm43, %v41, -inf
    %56 = vmax.xlane.f32.xlu0 %v55
    %v57 = vpop.xlane.xlu0 %56
    %v58 = vsub.f32 %v41, %v57
    %v59 = vmul.f32 %v58, 1.442695
    %v60 = vpow.pop %v59
    %v61 = vsel %vm43, %v60, 0.0
    %62 = vadd.xlane.f32.xlu0 %v61
    %v63 = vpop.xlane.xlu0 %62
    %v64 = vlog2.pop %v63
    %v65 = vmul.f32 %v64, 0.6931472
    %v66 = vsub.f32 %v46, %v57
    %v67 = vsub.f32 %v54, %v65
    %v68 = vadd.f32 %v66, %v67
    %v69 = vadd.f32 %v42, %v68
    %v70 = vmul.f32 %v60, %v69
    %v71 = vsel %vm43, %v70, 0.0
    %72 = vadd.xlane.f32.xlu0 %v71
    %v73 = vpop.xlane.xlu0 %72
    %v74 = vrcp.pop %v63
    %v75 = vmul.f32 %v63, %v74
    %v76 = vsub.f32 1.0, %v75
    %v77 = vmul.f32 %v74, %v76
    %v78 = vadd.f32 %v74, %v77
    %vm79 = vweird.f32 %v63
    %vm80 = vweird.f32 %v74
    %vm81 = vmor %vm79, %vm80
    %v82 = vsel %vm81, %v74, %v78
    %v83 = vand.u32 2147483647, %v63
    %vm84 = vcmp.eq.f32.partialorder %v83, 8.507059e+37
    %v85 = vand.u32 %v63, 2147483648
    %v86 = vor.u32 1.1754944e-38, %v85
    %v87 = vsel %vm84, %v86, %v82
    %v88 = vmul.f32 %v73, %v87
    %vm89 = vcmask 7168
    %v90 = vsel %vm89, %v88, 0.0
    %91 = vadd.xlane.f32.xlu0 %v90
    %v92 = vpop.xlane.xlu0 %91
    %v93 = vrot.slane %v92, 4
    %v94 = vadd.f32 %v92, %v93
    %v95 = vrot.slane %v94, 2
    %v96 = vadd.f32 %v94, %v95
    %v97 = vrot.slane %v96, 1
    %v98 = vadd.f32 %v96, %v97
    %s99 = vtos %v98
    %v100 = vstv %s99
    %101 = vst [vmem:[#allocation7] sm:$0xff] %v100
    // Predicated region
    $region18: #{tpu_custom_call.1} parent=1 // pred_check
      _
    $region19: #{tpu_custom_call.1} parent=1 // pred_check_branch
      %103 = sbr.rel (0) target = $region21
    $region20: #{tpu_custom_call.1} parent=1 // pred_region
      %105 = vsyncadd [#allocation4], 0
      %s107 = sshll.u32 [#allocation7], 4
      %s108 = int_to_ptr.vmem [resolvable:$true] %s107
      %s109 = sshll.u32 %s2, 4
      %s110 = int_to_ptr.hbm [resolvable:$true] %s109
      %112 = dma.vmem_to_hbm [thread:$0]  %s108, 128, %s110, [#allocation4]
    $region21: #{tpu_custom_call.1} parent=1 // pred_fallthru
      _
    // Predicated region
    $region22: #{tpu_custom_call.1} parent=1 // pred_check
      _
    $region23: #{tpu_custom_call.1} parent=1 // pred_check_branch
      %114 = sbr.rel (0) target = $region25
    $region24: #{tpu_custom_call.1} parent=1 // pred_region
      %116 = dma.done [#allocation4], 128
    $region25: #{tpu_custom_call.1} parent=1 // pred_fallthru
      _
    %117 = vsyncpa [#allocation3], 1
    %118 = vsyncpa [#allocation6], 1
    %119 = vsyncpa [#allocation4], 1

</llo_original>
